<compile_context>
chip_gen: v5e
topology: v5e:2x2
jax: 0.10.0
libtpu: 0.0.40
codegen_flags: <defaults>
</compile_context>

<pallas_src>
import functools

import jax
import jax.numpy as jnp
from jax.experimental import pallas as pl
from jax.experimental.pallas import tpu as pltpu

# eps in the PyTorch module is only used by get_s(); the returned loss (hue
# MSE) never touches it, so it is not needed in the kernel.
EPS = 1e-07


def _hsv_loss_kernel(x_ref, out_ref, acc_ref, *, h_target, rows_total,
                     tiles_per_split, need_mask):
    """x_ref: (1, 3, TR, C) block of the pixel view.  Accumulates sum((hue-h)^2)."""
    s = pl.program_id(0)          # parallel split (megacore)
    b = pl.program_id(1)          # batch (reduction)
    t = pl.program_id(2)          # pixel-row tile (reduction)

    @pl.when((b == 0) & (t == 0))
    def _init():
        acc_ref[0] = jnp.float32(0.0)

    # Channel planes; upcast to f32 in-VMEM (input may be bf16).
    r = x_ref[0, 0].astype(jnp.float32)     # (TR, C)
    g = x_ref[0, 1].astype(jnp.float32)
    bl = x_ref[0, 2].astype(jnp.float32)

    # Hue depends only on channel orderings and ratios of channel differences,
    # both invariant under the positive affine un-normalization (*0.5 + 0.5),
    # so compute directly on the raw [-1, 1] values.
    mx = jnp.maximum(jnp.maximum(r, g), bl)
    mn = jnp.minimum(jnp.minimum(r, g), bl)
    denom = mx - mn
    safe_denom = jnp.where(denom == 0.0, jnp.float32(1.0), denom)

    # PyTorch assigns the blue branch, then green, then red, so on ties the
    # red branch wins, then green, then blue.  Select numerator and additive
    # offset first so only a single division is needed (1/3 the EUP work).
    numer = jnp.where(r == mx, g - bl, jnp.where(g == mx, bl - r, r - g))
    offs = jnp.where(r == mx, jnp.float32(0.0),
                     jnp.where(g == mx, jnp.float32(2.0), jnp.float32(4.0)))
    hue6 = (offs + numer / safe_denom) * jnp.float32(1.0 / 6.0)
    hue = hue6 - jnp.floor(hue6)                      # == (hue/6) % 1  (floor-mod)
    hue = jnp.where(denom == 0.0, jnp.float32(0.0), hue)   # degenerate pixels -> 0

    d = hue - jnp.float32(h_target)
    sq = d * d

    if need_mask:
        # Last row-tile may hang past the real pixel rows (Pallas pads the
        # block); zero those contributions before reducing.
        tr, c = sq.shape
        row0 = (s * tiles_per_split + t) * tr
        rid = row0 + jax.lax.broadcasted_iota(jnp.int32, (tr, c), 0)
        sq = jnp.where(rid < rows_total, sq, jnp.float32(0.0))

    acc_ref[0] = acc_ref[0] + jnp.sum(sq)

    @pl.when((b == pl.num_programs(1) - 1) & (t == pl.num_programs(2) - 1))
    def _finalize():
        out_ref[...] = jnp.full((1, 1, 1), acc_ref[0], dtype=jnp.float32)


def hsv_loss(x, h_target=0.0, s_target=1.0, v_target=0.7, *, tile_rows=512):
    """x: (B, 3, H, W) array in [-1, 1].  Returns scalar MSE(hue, h_target).

    s_target / v_target are accepted for API parity but, exactly like the
    PyTorch forward(), do not contribute to the returned loss.
    """
    B, C, H, W = x.shape
    assert C == 3, "HSV loss expects 3-channel RGB input"
    HW = H * W
    LANE = 128

    # Lane-dense pixel view via a *contiguous* reshape (no HBM copy, no transpose).
    if HW % LANE == 0:
        rows, cols = HW // LANE, LANE
    else:
        rows, cols = H, W
    xr = x.reshape(B, 3, rows, cols)

    # Row tiling: full rows if small, else a sublane-aligned tile.
    tile_rows = max(8, (tile_rows // 8) * 8)
    tr = rows if rows <= tile_rows else tile_rows
    nt = pl.cdiv(rows, tr)                       # total row-tiles per image
    nsplit = 2 if (nt >= 2 and nt % 2 == 0) else 1   # megacore split (v7x)
    ntps = nt // nsplit                          # row-tiles per split
    need_mask = (rows % tr) != 0

    kernel = functools.partial(
        _hsv_loss_kernel,
        h_target=float(h_target),
        rows_total=rows,
        tiles_per_split=ntps,
        need_mask=need_mask,
    )

    n_px = B * HW
    cost = pl.CostEstimate(
        flops=28 * n_px,
        transcendentals=n_px,                    # one divide per pixel
        bytes_accessed=int(x.size * x.dtype.itemsize) + 4 * nsplit,
    )

    partials = pl.pallas_call(
        kernel,
        out_shape=jax.ShapeDtypeStruct((nsplit, 1, 1), jnp.float32),
        grid=(nsplit, B, ntps),
        in_specs=[
            pl.BlockSpec((1, 3, tr, cols),
                         lambda s, b, t: (b, 0, s * ntps + t, 0)),
        ],
        out_specs=pl.BlockSpec((1, 1, 1), lambda s, b, t: (s, 0, 0)),
        scratch_shapes=[pltpu.SMEM((1,), jnp.float32)],
        compiler_params=pltpu.CompilerParams(
            dimension_semantics=("parallel", "arbitrary", "arbitrary")),
        cost_estimate=cost,
    )(xr)

    return jnp.sum(partials) / jnp.float32(n_px)


def _hsv_loss_ref(x, h_target=0.0):
    """Pure-JAX reference mirroring the PyTorch code (for correctness check)."""
    img = x.astype(jnp.float32) * 0.5 + 0.5
    r, g, b = img[:, 0], img[:, 1], img[:, 2]
    mx = jnp.max(img, axis=1)
    mn = jnp.min(img, axis=1)
    denom = mx - mn
    hue_b = 4.0 + (r - g) / denom
    hue_g = 2.0 + (b - r) / denom
    hue_r = (g - b) / denom
    hue = jnp.where(r == mx, hue_r, jnp.where(g == mx, hue_g, hue_b))
    hue = jnp.mod(hue / 6.0, 1.0)
    hue = jnp.where(mn == mx, 0.0, hue)
    return jnp.mean((hue - h_target) ** 2)


if __name__ == "__main__":
    key = jax.random.PRNGKey(0)
    k1, k2, k3 = jax.random.split(key, 3)

    # Primary check: small NCHW image batch in [-1, 1].
    x1 = jax.random.uniform(k1, (2, 3, 16, 16), jnp.float32, minval=-1.0, maxval=1.0)
    out1 = jax.block_until_ready(hsv_loss(x1))
    ref1 = jax.block_until_ready(_hsv_loss_ref(x1))
    assert jnp.isfinite(out1), f"non-finite loss: {out1}"
    assert jnp.allclose(out1, ref1, rtol=1e-5, atol=1e-6), f"{out1} vs {ref1}"

    # Exercise row tiling with a remainder tile (padding mask path).
    x2 = jax.random.uniform(k2, (1, 3, 48, 48), jnp.float32, minval=-1.0, maxval=1.0)
    out2 = jax.block_until_ready(hsv_loss(x2, tile_rows=8))
    ref2 = jax.block_until_ready(_hsv_loss_ref(x2))
    assert jnp.allclose(out2, ref2, rtol=1e-5, atol=1e-6), f"{out2} vs {ref2}"

    # Exercise the 2-way 'parallel' split and the bf16 pass-through path.
    x3 = jax.random.uniform(k3, (2, 3, 64, 64), jnp.float32, minval=-1.0,
                            maxval=1.0).astype(jnp.bfloat16)
    out3 = jax.block_until_ready(hsv_loss(x3, tile_rows=8))
    ref3 = jax.block_until_ready(_hsv_loss_ref(x3))
    assert jnp.allclose(out3, ref3, rtol=1e-4, atol=1e-5), f"{out3} vs {ref3}"

    print("KERNEL_OK")
</pallas_src>

<mosaic_0001>
module attributes {stable_mosaic.version = 11 : i64} {
  func.func @_hsv_loss_kernel(%arg0: i32, %arg1: i32, %arg2: i32, %arg3: memref<1x3x2x128xf32, #tpu.memory_space<vmem>>, %arg4: memref<1x1x1xf32, #tpu.memory_space<vmem>>, %arg5: memref<1xf32, #tpu.memory_space<smem>>) attributes {dimension_semantics = [#tpu.dimension_semantics<parallel>, #tpu.dimension_semantics<arbitrary>, #tpu.dimension_semantics<arbitrary>], iteration_bounds = array<i64: 1, 2, 1>, scalar_prefetch = 0 : i64, scratch_operands = 1 : i64, tpu.core_type = #tpu.core_type<tc>, window_params = [{transform_indices = @transform_0, window_bounds = array<i64: 1, 3, 2, 128>}, {transform_indices = @transform_1, window_bounds = array<i64: 1, 1, 1>}]} {
    %c0_i32 = arith.constant 0 : i32
    %0 = arith.cmpi eq, %arg1, %c0_i32 : i32
    %c0_i32_0 = arith.constant 0 : i32
    %1 = arith.cmpi eq, %arg2, %c0_i32_0 : i32
    %2 = arith.andi %0, %1 : i1
    %3 = arith.extui %2 : i1 to i32
    %c0_i32_1 = arith.constant 0 : i32
    %4 = arith.cmpi ne, %3, %c0_i32_1 : i32
    scf.if %4 {
      %cst_24 = arith.constant 0.000000e+00 : f32
      %c0_25 = arith.constant 0 : index
      %59 = memref.load %arg5[%c0_25] : memref<1xf32, #tpu.memory_space<smem>>
      memref.store %cst_24, %arg5[%c0_25] : memref<1xf32, #tpu.memory_space<smem>>
    } else {
    }
    %c0 = arith.constant 0 : index
    %c0_2 = arith.constant 0 : index
    %c0_3 = arith.constant 0 : index
    %c0_4 = arith.constant 0 : index
    %5 = vector.load %arg3[%c0, %c0_2, %c0_3, %c0_4] : memref<1x3x2x128xf32, #tpu.memory_space<vmem>>, vector<1x1x2x128xf32>
    %6 = vector.shape_cast %5 : vector<1x1x2x128xf32> to vector<2x128xf32>
    %c0_5 = arith.constant 0 : index
    %c1 = arith.constant 1 : index
    %c0_6 = arith.constant 0 : index
    %c0_7 = arith.constant 0 : index
    %7 = vector.load %arg3[%c0_5, %c1, %c0_6, %c0_7] : memref<1x3x2x128xf32, #tpu.memory_space<vmem>>, vector<1x1x2x128xf32>
    %8 = vector.shape_cast %7 : vector<1x1x2x128xf32> to vector<2x128xf32>
    %c0_8 = arith.constant 0 : index
    %c2 = arith.constant 2 : index
    %c0_9 = arith.constant 0 : index
    %c0_10 = arith.constant 0 : index
    %9 = vector.load %arg3[%c0_8, %c2, %c0_9, %c0_10] : memref<1x3x2x128xf32, #tpu.memory_space<vmem>>, vector<1x1x2x128xf32>
    %10 = vector.shape_cast %9 : vector<1x1x2x128xf32> to vector<2x128xf32>
    %11 = arith.maximumf %6, %8 : vector<2x128xf32>
    %12 = arith.maximumf %11, %10 : vector<2x128xf32>
    %13 = arith.minimumf %6, %8 : vector<2x128xf32>
    %14 = arith.minimumf %13, %10 : vector<2x128xf32>
    %15 = arith.subf %12, %14 : vector<2x128xf32>
    %cst = arith.constant 0.000000e+00 : f32
    %16 = vector.broadcast %cst : f32 to vector<2x128xf32>
    %17 = arith.cmpf oeq, %15, %16 : vector<2x128xf32>
    %cst_11 = arith.constant 1.000000e+00 : f32
    %18 = vector.broadcast %cst_11 : f32 to vector<2x128xf32>
    %19 = arith.select %17, %18, %15 : vector<2x128xi1>, vector<2x128xf32>
    %20 = arith.cmpf oeq, %6, %12 : vector<2x128xf32>
    %21 = arith.subf %8, %10 : vector<2x128xf32>
    %22 = arith.cmpf oeq, %8, %12 : vector<2x128xf32>
    %23 = arith.subf %10, %6 : vector<2x128xf32>
    %24 = arith.subf %6, %8 : vector<2x128xf32>
    %25 = arith.select %22, %23, %24 : vector<2x128xi1>, vector<2x128xf32>
    %26 = arith.select %20, %21, %25 : vector<2x128xi1>, vector<2x128xf32>
    %27 = arith.cmpf oeq, %6, %12 : vector<2x128xf32>
    %28 = arith.cmpf oeq, %8, %12 : vector<2x128xf32>
    %cst_12 = arith.constant 2.000000e+00 : f32
    %cst_13 = arith.constant 4.000000e+00 : f32
    %29 = vector.broadcast %cst_12 : f32 to vector<2x128xf32>
    %30 = vector.broadcast %cst_13 : f32 to vector<2x128xf32>
    %31 = arith.select %28, %29, %30 : vector<2x128xi1>, vector<2x128xf32>
    %cst_14 = arith.constant 0.000000e+00 : f32
    %32 = vector.broadcast %cst_14 : f32 to vector<2x128xf32>
    %33 = arith.select %27, %32, %31 : vector<2x128xi1>, vector<2x128xf32>
    %34 = arith.divf %26, %19 : vector<2x128xf32>
    %35 = arith.addf %33, %34 : vector<2x128xf32>
    %cst_15 = arith.constant 0.166666672 : f32
    %36 = vector.broadcast %cst_15 : f32 to vector<2x128xf32>
    %37 = arith.mulf %35, %36 : vector<2x128xf32>
    %38 = math.floor %37 : vector<2x128xf32>
    %39 = arith.subf %37, %38 : vector<2x128xf32>
    %cst_16 = arith.constant 0.000000e+00 : f32
    %40 = vector.broadcast %cst_16 : f32 to vector<2x128xf32>
    %41 = arith.cmpf oeq, %15, %40 : vector<2x128xf32>
    %cst_17 = arith.constant 0.000000e+00 : f32
    %42 = vector.broadcast %cst_17 : f32 to vector<2x128xf32>
    %43 = arith.select %41, %42, %39 : vector<2x128xi1>, vector<2x128xf32>
    %cst_18 = arith.constant 0.000000e+00 : f32
    %44 = vector.broadcast %cst_18 : f32 to vector<2x128xf32>
    %45 = arith.subf %43, %44 : vector<2x128xf32>
    %46 = arith.mulf %45, %45 : vector<2x128xf32>
    %c0_19 = arith.constant 0 : index
    %47 = memref.load %arg5[%c0_19] : memref<1xf32, #tpu.memory_space<smem>>
    %48 = vector.shape_cast %46 : vector<2x128xf32> to vector<1x2x128xf32>
    %cst_20 = arith.constant dense<0.000000e+00> : vector<1xf32>
    %49 = vector.multi_reduction <add>, %48, %cst_20 [1, 2] : vector<1x2x128xf32> to vector<1xf32>
    %50 = vector.shape_cast %49 : vector<1xf32> to vector<1x1x1xf32>
    %51 = vector.extract %50[0, 0, 0] : f32 from vector<1x1x1xf32>
    %52 = arith.addf %47, %51 : f32
    %c0_21 = arith.constant 0 : index
    %53 = memref.load %arg5[%c0_21] : memref<1xf32, #tpu.memory_space<smem>>
    memref.store %52, %arg5[%c0_21] : memref<1xf32, #tpu.memory_space<smem>>
    %c1_i32 = arith.constant 1 : i32
    %54 = arith.cmpi eq, %arg1, %c1_i32 : i32
    %c0_i32_22 = arith.constant 0 : i32
    %55 = arith.cmpi eq, %arg2, %c0_i32_22 : i32
    %56 = arith.andi %54, %55 : i1
    %57 = arith.extui %56 : i1 to i32
    %c0_i32_23 = arith.constant 0 : i32
    %58 = arith.cmpi ne, %57, %c0_i32_23 : i32
    scf.if %58 {
      %c0_24 = arith.constant 0 : index
      %59 = memref.load %arg5[%c0_24] : memref<1xf32, #tpu.memory_space<smem>>
      %60 = vector.broadcast %59 : f32 to vector<1x1x1xf32>
      %c0_25 = arith.constant 0 : index
      %c0_26 = arith.constant 0 : index
      %c0_27 = arith.constant 0 : index
      %61 = vector.load %arg4[%c0_25, %c0_26, %c0_27] : memref<1x1x1xf32, #tpu.memory_space<vmem>>, vector<1x1x1xf32>
      tpu.vector_store %arg4[%c0_25, %c0_26, %c0_27], %60 {strides = array<i32>} : memref<1x1x1xf32, #tpu.memory_space<vmem>>, vector<1x1x1xf32>,
    } else {
    }
    return
  }
  func.func @transform_0(%arg0: i32, %arg1: i32, %arg2: i32) -> (i32, i32, i32, i32) {
    %c1_i32 = arith.constant 1 : i32
    %0 = arith.muli %arg0, %c1_i32 : i32
    %1 = arith.addi %0, %arg2 : i32
    %c0_i32 = arith.constant 0 : i32
    %c0_i32_0 = arith.constant 0 : i32
    %c0_i32_1 = arith.constant 0 : i32
    return %arg1, %c0_i32, %1, %c0_i32_0 : i32, i32, i32, i32
  }
  func.func @transform_1(%arg0: i32, %arg1: i32, %arg2: i32) -> (i32, i32, i32) {
    %c0_i32 = arith.constant 0 : i32
    %c0_i32_0 = arith.constant 0 : i32
    %c0_i32_1 = arith.constant 0 : i32
    return %arg0, %c0_i32, %c0_i32_0 : i32, i32, i32
  }
}

</mosaic_0001>

<llo_original>
// kernel: tpu_custom_call.1
$region0: #{tpu_custom_call.1}
  #allocation0 [shape = 'u32[]', space=smem, size = 0x4, offset = 0x4, fixed_abs, tag = 'smem constant byte address 0x4 - core index']
  #allocation1 [shape = 'u32[72,128]{1,0:T(1,128)}', space=vmem, size = 0x9000, scoped, tag = 'internal scratch']
  #allocation2 [shape = 'f32[1]{0:T(128)}', space=smem, size = 0x200, scoped, tag = 'scratch operand']
  %s0 = inlined_call_operand.hbm [shape: f32[2,3,2,128], index: 0, kind: input, shape index: {}]
  %s1 = inlined_call_operand.hbm [shape: f32[1,1,1], index: 1, kind: output, shape index: {}]
  %s2 = sld [smem:[#allocation0]]
  $region49: #{tpu_custom_call.1} parent=0
    _
  %s4 = ssub.s32 1, %s2
  %s5 = scalar_select 0, %s4, %s2
  $region1: #{tpu_custom_call.1} parent=0
    #allocation3 [shape = 'u8[6144]{0}', space=vmem, size = 0x1800, scoped, tag = 'input window, operand 0']
    #allocation4 [shape = 's32[2]{0}', space=sflag, size = 0x8, scoped, tag = 'scoped memory for tpu_custom_call.1']
    #allocation5 [shape = 's32[2]{0}', space=sflag, size = 0x8, scoped, tag = 'scoped memory for tpu_custom_call.1']
    #allocation6 [shape = 'u8[512]{0}', space=vmem, size = 0x400, scoped, tag = 'output window, operand 0, single buffered']
    %6 = vsyncpa [#allocation4], 0
    %s7 = scalar_lea.sflag [#allocation4], 1
    %8 = vsyncpa %s7, 0
    %9 = vsyncpa [#allocation5], 0
    loop: start=0, step=1, limit=4
    $region2: #{tpu_custom_call.1} parent=1 // loop_pre_header
      _
    $region3: #{tpu_custom_call.1} parent=1 // loop_header
      %s11 = sphi 0, %s15
      %p12 = scmp.ge.s32.totalorder %s11, 4
      %s18 = sphi 0, %s37
      %s19 = sphi 0, %s33
      %s20 = sphi 0, %s29
      %s21 = sphi 0, %s18
      %s22 = sphi 0, %s19
      %s23 = sphi 0, %s20
      %s24 = sphi 0, %s21
      %s25 = sphi 0, %s22
      %s26 = sphi 0, %s23
      %s44 = sphi 0, %s46
      %s47 = sphi 0, %s44
      %s48 = sphi 0, %s47
      %s64 = sphi 0, %s48
      %s70 = sphi 0, %s72
      %s73 = sphi 0, %s70
      %s74 = sphi 0, %s73
      %s90 = sphi 0, %s74
    $region4: #{tpu_custom_call.1} parent=1 // loop_header_branch
      %14 = sbr.rel (%p12) target = $region8
    $region5: #{tpu_custom_call.1} parent=1 // loop_body
      %s16 = ssub.s32 %s11, 1
      %s17 = ssub.s32 %s11, 2
      %s27 = sadd.s32 1, %s20
      %p28 = scmp.ge.s32.totalorder %s27, 1
      %s29 = scalar_select %p28, 0, %s27
      %s30 = sadd.s32 1, %s19
      %s31 = scalar_select %p28, %s30, %s19
      %p32 = scmp.ge.s32.totalorder %s31, 2
      %s33 = scalar_select %p32, 0, %s31
      %s34 = sadd.s32 1, %s18
      %s35 = scalar_select %p32, %s34, %s18
      %p36 = scmp.ge.s32.totalorder %s35, 1
      %s37 = scalar_select %p36, 0, %s35
      %s38 = sadd.s32 %s18, %s20
      %s39 = sadd.s32 %s37, %s29
      %s40 = ssub.s32 %s19, %s33
      %s41 = ssub.s32 %s38, %s39
      %s42 = sor.u32 %s40, %s41
      %p43 = scmp.eq.s32.totalorder %s42, 0
      %s45 = sadd.s32 %s44, 1
      %s46 = scalar_select %p43, %s44, %s45
      %p49 = pneg %p43
      %p50 = scmp.eq.s32.totalorder %s11, 1
      %p51 = por %p49, %p50
      %p52 = scmp.ne.s32.totalorder %s44, %s47
      %p53 = scmp.eq.s32.totalorder %s11, 0
      %p54 = por %p52, %p53
      %p55 = scmp.ne.s32.totalorder %s44, %s47
      %p56 = scmp.eq.s32.totalorder %s16, 1
      %p57 = por %p55, %p56
      %p58 = scmp.ne.s32.totalorder %s47, %s48
      %p59 = scmp.eq.s32.totalorder %s16, 0
      %p60 = por %p58, %p59
      %p61 = scmp.ne.s32.totalorder %s47, %s48
      %p62 = scmp.eq.s32.totalorder %s17, 1
      %p63 = por %p61, %p62
      %p65 = scmp.ne.s32.totalorder %s48, %s64
      %p66 = scmp.eq.s32.totalorder %s17, 0
      %p67 = por %p65, %p66
      %s68 = ssub.s32 %s18, %s37
      %p69 = scmp.eq.s32.totalorder %s68, 0
      %s71 = sadd.s32 %s70, 1
      %s72 = scalar_select %p69, %s70, %s71
      %p75 = pneg %p69
      %p76 = scmp.eq.s32.totalorder %s11, 1
      %p77 = por %p75, %p76
      %p78 = scmp.ne.s32.totalorder %s70, %s73
      %p79 = scmp.eq.s32.totalorder %s11, 0
      %p80 = por %p78, %p79
      %p81 = scmp.ne.s32.totalorder %s70, %s73
      %p82 = scmp.eq.s32.totalorder %s16, 1
      %p83 = por %p81, %p82
      %p84 = scmp.ne.s32.totalorder %s73, %s74
      %p85 = scmp.eq.s32.totalorder %s16, 0
      %p86 = por %p84, %p85
      %p87 = scmp.ne.s32.totalorder %s73, %s74
      %p88 = scmp.eq.s32.totalorder %s17, 1
      %p89 = por %p87, %p88
      %p91 = scmp.ne.s32.totalorder %s74, %s90
      %p92 = scmp.eq.s32.totalorder %s17, 0
      %p93 = por %p91, %p92
      %p94 = scmp.le.s32.totalorder 1, %s11
      %p95 = scmp.lt.s32.totalorder %s11, 3
      %p96 = pnand %p94, %p95
      %p97 = pneg %p96
      // Predicated region
      $region9: #{tpu_custom_call.1} parent=5 // pred_check
        _
      $region10: #{tpu_custom_call.1} parent=5 // pred_check_branch
        %99 = sbr.rel (%p96) target = $region12
      $region11: #{tpu_custom_call.1} parent=5 // pred_region
        %s100 = ssub.s32 %s11, 1
      $region12: #{tpu_custom_call.1} parent=5 // pred_fallthru
        _
      %p101 = scmp.lt.s32.totalorder %s11, 2
      // Predicated region
      $region13: #{tpu_custom_call.1} parent=5 // pred_check
        %p102 = pneg %p101
      $region14: #{tpu_custom_call.1} parent=5 // pred_check_branch
        %104 = sbr.rel (%p102) target = $region16
      $region15: #{tpu_custom_call.1} parent=5 // pred_region
        // Predicated region
        $region17: #{tpu_custom_call.1} parent=15 // pred_check
          %p105 = pneg %p54
        $region18: #{tpu_custom_call.1} parent=15 // pred_check_branch
          %107 = sbr.rel (%p105) target = $region20
        $region19: #{tpu_custom_call.1} parent=15 // pred_region
          %s108 = sand.u32 %s44, 1
          %s109 = scalar_lea.sflag [#allocation4], %s108
          %s110 = sand.u32 %s44, 1
          %s111 = smul.addr %s110, 6
          %s112 = scalar_lea.vmem [#allocation3], %s111
          %s113 = sadd.s32 %s18, %s20
          %115 = vsyncadd %s109, 0
          %s116 = smul.addr %s19, 3
          %s117 = sadd.s32 %s113, %s116
          %s118 = smul.addr %s117, 2
          %s119 = scalar_lea.hbm %s0, %s118
          %s120 = sshll.u32 %s119, 4
          %s121 = int_to_ptr.hbm [resolvable:$true] %s120
          %s122 = sshll.u32 %s112, 4
          %s123 = int_to_ptr.vmem [resolvable:$true] %s122
          %128 = dma.hbm_to_vmem [thread:$0]  %s121, 96, %s123, %s109, 32, 32, 2
        $region20: #{tpu_custom_call.1} parent=15 // pred_fallthru
          _
      $region16: #{tpu_custom_call.1} parent=5 // pred_fallthru
        _
      %p129 = scmp.le.s32.totalorder 1, %s11
      %p130 = scmp.lt.s32.totalorder %s11, 3
      %p131 = pnand %p129, %p130
      %p132 = pneg %p131
      // Predicated region
      $region21: #{tpu_custom_call.1} parent=5 // pred_check
        _
      $region22: #{tpu_custom_call.1} parent=5 // pred_check_branch
        %134 = sbr.rel (%p131) target = $region24
      $region23: #{tpu_custom_call.1} parent=5 // pred_region
        %s135 = ssub.s32 %s11, 1
        %s136 = sand.u32 %s47, 1
        %s137 = scalar_lea.sflag [#allocation4], %s136
        %s138 = sand.u32 %s47, 1
        %s139 = smul.addr %s138, 6
        %s140 = scalar_lea.vmem [#allocation3], %s139
        // Predicated region
        $region25: #{tpu_custom_call.1} parent=23 // pred_check
          %p141 = pneg %p60
        $region26: #{tpu_custom_call.1} parent=23 // pred_check_branch
          %143 = sbr.rel (%p141) target = $region28
        $region27: #{tpu_custom_call.1} parent=23 // pred_region
          %145 = dma.done %s137, 96
        $region28: #{tpu_custom_call.1} parent=23 // pred_fallthru
          _
        %s146 = sand.u32 %s47, 1
        %s147 = scalar_lea.sflag [#allocation4], %s146
        %s148 = sand.u32 %s47, 1
        %s149 = smul.addr %s148, 6
        %s150 = scalar_lea.vmem [#allocation3], %s149
        %p151 = pneg %p60
        %p152 = pneg %p57
        %p153 = pneg %p86
        %p154 = pneg %p83
        %s155 = sadd.s32 %s21, %s23
        %p156 = scmp.eq.s32.totalorder %s22, 0
        %p157 = scmp.eq.s32.totalorder %s23, 0
        %p158 = pnand %p156, %p157
        %p159 = pneg %p158
        // Predicated region
        $region29: #{tpu_custom_call.1} parent=23 // pred_check
          _
        $region30: #{tpu_custom_call.1} parent=23 // pred_check_branch
          %161 = sbr.rel (%p158) target = $region32
        $region31: #{tpu_custom_call.1} parent=23 // pred_region
          %s162 = scalar_lea.smem [#allocation2], 0
          %163 = sst [smem:[%s162]] 0.0
        $region32: #{tpu_custom_call.1} parent=23 // pred_fallthru
          _
        %v164 = vld [vmem:[%s140] sm:$0x3]
        %s165 = scalar_lea.vmem %s140, 2 [#allocation3]
        %v166 = vld [vmem:[%s165] sm:$0x3]
        %s167 = scalar_lea.vmem %s140, 4 [#allocation3]
        %v168 = vld [vmem:[%s167] sm:$0x3]
        %v169 = vmax.f32 %v164, %v166
        %v170 = vmax.f32 %v169, %v168
        %v171 = vmin.f32 %v164, %v166
        %v172 = vmin.f32 %v171, %v168
        %v173 = vsub.f32 %v170, %v172
        %vm174 = vcmp.eq.f32.partialorder %v173, 0.0
        %v175 = vsel %vm174, 1.0, %v173
        %vm176 = vcmp.eq.f32.partialorder %v164, %v170
        %v177 = vsub.f32 %v166, %v168
        %vm178 = vcmp.eq.f32.partialorder %v166, %v170
        %v179 = vsub.f32 %v168, %v164
        %v180 = vsub.f32 %v164, %v166
        %v181 = vsel %vm178, %v179, %v180
        %v182 = vsel %vm176, %v177, %v181
        %v183 = vsel %vm178, 2.0, 4.0
        %v184 = vsel %vm176, 0.0, %v183
        %v185 = vrcp.pop %v175
        %v186 = vmul.f32 %v175, %v185
        %v187 = vsub.f32 1.0, %v186
        %v188 = vmul.f32 %v185, %v187
        %v189 = vadd.f32 %v185, %v188
        %vm190 = vweird.f32 %v175
        %vm191 = vweird.f32 %v185
        %vm192 = vmor %vm190, %vm191
        %v193 = vsel %vm192, %v185, %v189
        %v194 = vand.u32 2147483647, %v175
        %vm195 = vcmp.eq.f32.partialorder %v194, 8.507059e+37
        %v196 = vand.u32 %v175, 2147483648
        %v197 = vor.u32 1.1754944e-38, %v196
        %v198 = vsel %vm195, %v197, %v193
        %v199 = vmul.f32 %v182, %v198
        %v200 = vadd.f32 %v184, %v199
        %v201 = vmul.f32 %v200, 0.16666667
        %v202 = vfloor.f32 %v201
        %v203 = vsub.f32 %v201, %v202
        %v204 = vsel %vm174, 0.0, %v203
        %v205 = vmul.f32 %v204, %v204
        %s206 = sld [smem:[#allocation2]]
        %vm207 = vcmask 1041408
        %v208 = vsel %vm207, %v205, 0.0
        %209 = vadd.xlane.f32.xlu0 %v208
        %v210 = vpop.xlane.xlu0 %209
        %v211 = vrot.slane %v210, 4
        %v212 = vadd.f32 %v210, %v211
        %v213 = vrot.slane %v212, 2
        %v214 = vadd.f32 %v212, %v213
        %v215 = vrot.slane %v214, 1
        %v216 = vadd.f32 %v214, %v215
        %s217 = vtos %v216
        %s218 = sadd.f32 %s206, %s217
        %s219 = scalar_lea.smem [#allocation2], 0
        %220 = sst [smem:[%s219]] %s218
        %p221 = scmp.eq.s32.totalorder %s22, 1
        %p222 = pnand %p221, %p157
        %p223 = pneg %p222
        // Predicated region
        $region33: #{tpu_custom_call.1} parent=23 // pred_check
          _
        $region34: #{tpu_custom_call.1} parent=23 // pred_check_branch
          %225 = sbr.rel (%p222) target = $region36
        $region35: #{tpu_custom_call.1} parent=23 // pred_region
          %s226 = sld [smem:[#allocation2]]
          %v227 = vstv %s226
          %vm228 = vcmask 0
          %229 = vst.msk [vmem:[#allocation6] sm:$0x1] %vm228, %v227
        $region36: #{tpu_custom_call.1} parent=23 // pred_fallthru
          _
        // Predicated region
        $region37: #{tpu_custom_call.1} parent=23 // pred_check
          %p230 = pneg %p83
        $region38: #{tpu_custom_call.1} parent=23 // pred_check_branch
          %232 = sbr.rel (%p230) target = $region40
        $region39: #{tpu_custom_call.1} parent=23 // pred_region
          %234 = vsyncadd [#allocation5], 0
          %s235 = scalar_lea.hbm %s1, %s21
          %s237 = sshll.u32 [#allocation6], 4
          %s238 = int_to_ptr.vmem [resolvable:$true] %s237
          %s239 = sshll.u32 %s235, 4
          %s240 = int_to_ptr.hbm [resolvable:$true] %s239
          %242 = dma.vmem_to_hbm [thread:$0]  %s238, 16, %s240, [#allocation5]
        $region40: #{tpu_custom_call.1} parent=23 // pred_fallthru
          _
        // Predicated region
        $region41: #{tpu_custom_call.1} parent=23 // pred_check
          %p243 = pneg %p83
        $region42: #{tpu_custom_call.1} parent=23 // pred_check_branch
          %245 = sbr.rel (%p243) target = $region44
        $region43: #{tpu_custom_call.1} parent=23 // pred_region
          %247 = dma.done [#allocation5], 16
        $region44: #{tpu_custom_call.1} parent=23 // pred_fallthru
          _
      $region24: #{tpu_custom_call.1} parent=5 // pred_fallthru
        _
      %p248 = scmp.le.s32.totalorder 2, %s11
      // Predicated region
      $region45: #{tpu_custom_call.1} parent=5 // pred_check
        %p249 = pneg %p248
      $region46: #{tpu_custom_call.1} parent=5 // pred_check_branch
        %251 = sbr.rel (%p249) target = $region48
      $region47: #{tpu_custom_call.1} parent=5 // pred_region
        %s252 = ssub.s32 %s11, 2
      $region48: #{tpu_custom_call.1} parent=5 // pred_fallthru
        _
    $region6: #{tpu_custom_call.1} parent=1 // loop_footer
      %s15 = sadd.s32 1, %s11
    $region7: #{tpu_custom_call.1} parent=1 // loop_footer_branch
      %10 = sbr.rel target = $region3
    $region8: #{tpu_custom_call.1} parent=1 // loop_exit
      _
    %253 = vsyncpa [#allocation4], 1
    %s254 = scalar_lea.sflag [#allocation4], 1
    %255 = vsyncpa %s254, 1
    %256 = vsyncpa [#allocation5], 1
    %s257 = scalar_lea.sflag [#allocation5], 1
    %258 = vsyncpa %s257, 1

</llo_original>
